<compile_context>
chip_gen: v7x
topology: tpu7x:2x2x1
jax: 0.10.0
libtpu: 0.0.40
codegen_flags: <defaults>
</compile_context>

<pallas_src>
import functools

import jax
import jax.numpy as jnp
from jax.experimental import pallas as pl
from jax.experimental.pallas import tpu as pltpu


def _attention_kernel(o_ref, c_ref, wqT_ref, bq_ref, wmT_ref, woT_ref, bo_ref,
                      y_ref, a_ref, *, approx_recip=False):
    nb, out_len, dec = o_ref.shape
    _, in_len, attn_size = c_ref.shape
    rb = nb * out_len

    o = o_ref[...]                                    # (nb, out_len, dec)
    c = c_ref[...]                                    # (nb, in_len, attn)
    o_flat = o.reshape(rb, dec)                       # relabel (out_len % 8 == 0)

    # general-mode projection over the flattened rows (fills the MXU M dim).
    mapped = (jnp.dot(o_flat, wqT_ref[...], preferred_element_type=jnp.float32)
              + bq_ref[...])                          # (rb, attn) f32
    mapped = mapped.reshape(nb, out_len, attn_size)

    # scores: contraction over the feature axis; the context "transpose" is
    # folded into the dot_general (no XLU transpose / VMEM temporary).
    scores = jnp.einsum("boa,bia->boi", mapped, c,
                        preferred_element_type=jnp.float32)   # (nb, out_len, in_len)

    # row-wise softmax (matches F.softmax(attn.view(-1, in_len), dim=1)).
    m = jnp.max(scores, axis=-1, keepdims=True)
    p = jnp.exp(scores - m)
    denom = jnp.sum(p, axis=-1, keepdims=True)
    attn = p * pl.reciprocal(denom, approx=approx_recip)

    # mix = attn @ context.
    mix = jnp.einsum("boi,bia->boa", attn, c,
                     preferred_element_type=jnp.float32)      # (nb, out_len, attn)
    mix_flat = mix.reshape(rb, attn_size)

    # linear_out on concat([mix, output]) expressed as a split matmul (no VMEM concat).
    pre = (jnp.dot(mix_flat, wmT_ref[...], preferred_element_type=jnp.float32)
           + jnp.dot(o_flat, woT_ref[...], preferred_element_type=jnp.float32)
           + bo_ref[...])                             # (rb, dec)
    y_ref[...] = jnp.tanh(pre).reshape(nb, out_len, dec).astype(y_ref.dtype)
    a_ref[...] = attn.astype(a_ref.dtype)


def prepare_attention_params(params, attn_size):
    """One-time weight prep, hoisted out of the per-call path (run once / cache):
    transposes, bias row-vectors, and the concat-split of linear_out's weight."""
    return {
        "wqT": jnp.asarray(params["attn_w_w"]).T,               # (dec, attn)
        "bq":  jnp.asarray(params["attn_w_b"]).reshape(1, -1),  # (1, attn)
        "wmT": jnp.asarray(params["lout_w"])[:, :attn_size].T,  # (attn, dec)  -> mix half
        "woT": jnp.asarray(params["lout_w"])[:, attn_size:].T,  # (dec, dec)   -> output half
        "bo":  jnp.asarray(params["lout_b"]).reshape(1, -1),    # (1, dec)
    }


def attention_forward(output, context, prep, *, batch_blocks=None, approx_recip=False):
    """output: (B, out_len, dec), context: (B, in_len, attn) -> (y, attn).

    batch_blocks=None -> gridless single invocation (right form for 1-TC v5e/v6e).
    batch_blocks=2    -> grid=(2,), dimension_semantics=("parallel",) so a v7x
                         chip's two TensorCores each take half the batch
                         (correct, just sequential, on single-TC chips).
    """
    B, out_len, dec_size = output.shape
    _, in_len, attn_size = context.shape
    R = B * out_len

    kernel = functools.partial(_attention_kernel, approx_recip=approx_recip)

    out_shape = (jax.ShapeDtypeStruct((B, out_len, dec_size), jnp.float32),
                 jax.ShapeDtypeStruct((B, out_len, in_len), jnp.float32))

    # Advisory cost for XLA's scheduler, from the true (unpadded) dims.
    flops = (2 * R * dec_size * attn_size                       # mapped projection
             + 2 * R * in_len * attn_size                       # scores
             + 2 * R * in_len * attn_size                       # mix
             + 2 * R * (attn_size + dec_size) * dec_size)       # linear_out split matmul
    transcendentals = R * in_len + R * dec_size                 # exp + tanh
    bytes_accessed = 4 * (output.size + context.size
                          + prep["wqT"].size + prep["wmT"].size + prep["woT"].size
                          + prep["bq"].size + prep["bo"].size
                          + R * dec_size + R * in_len)
    cost = pl.CostEstimate(flops=int(flops),
                           transcendentals=int(transcendentals),
                           bytes_accessed=int(bytes_accessed))

    args = (output, context,
            prep["wqT"], prep["bq"], prep["wmT"], prep["woT"], prep["bo"])

    if batch_blocks is None:
        vmem = pltpu.MemorySpace.VMEM
        return pl.pallas_call(
            kernel,
            out_shape=out_shape,
            in_specs=[pl.BlockSpec(memory_space=vmem)] * len(args),
            out_specs=(pl.BlockSpec(memory_space=vmem),
                       pl.BlockSpec(memory_space=vmem)),
            cost_estimate=cost,
        )(*args)

    assert B % batch_blocks == 0, "batch must divide evenly over batch blocks"
    bb = B // batch_blocks
    const2 = lambda b: (0, 0)                   # shared weights: constant block index
    in_specs = [
        pl.BlockSpec((bb, out_len, dec_size), lambda b: (b, 0, 0)),
        pl.BlockSpec((bb, in_len, attn_size), lambda b: (b, 0, 0)),
        pl.BlockSpec((dec_size, attn_size), const2),   # wqT
        pl.BlockSpec((1, attn_size), const2),          # bq
        pl.BlockSpec((attn_size, dec_size), const2),   # wmT
        pl.BlockSpec((dec_size, dec_size), const2),    # woT
        pl.BlockSpec((1, dec_size), const2),           # bo
    ]
    out_specs = (
        pl.BlockSpec((bb, out_len, dec_size), lambda b: (b, 0, 0)),
        pl.BlockSpec((bb, out_len, in_len), lambda b: (b, 0, 0)),
    )
    return pl.pallas_call(
        kernel,
        out_shape=out_shape,
        grid=(batch_blocks,),
        in_specs=in_specs,
        out_specs=out_specs,
        compiler_params=pltpu.CompilerParams(dimension_semantics=("parallel",)),
        cost_estimate=cost,
    )(*args)


def _reference(output, context, params):
    """Plain-JAX reference mirroring the PyTorch forward (mode='general', project=True)."""
    mapped = output @ params["attn_w_w"].T + params["attn_w_b"]
    scores = jnp.einsum("bod,bid->boi", mapped, context)
    attn = jax.nn.softmax(scores, axis=-1)
    mix = jnp.einsum("boi,bia->boa", attn, context)
    combined = jnp.concatenate([mix, output], axis=-1)
    y = jnp.tanh(combined @ params["lout_w"].T + params["lout_b"])
    return y, attn


if __name__ == "__main__":
    dec_size, attn_size = 32, 32
    batch, out_len, in_len = 2, 8, 8

    key = jax.random.PRNGKey(0)
    k_out, k_ctx, k1, k2, k3, k4 = jax.random.split(key, 6)

    output = jax.random.normal(k_out, (batch, out_len, dec_size), jnp.float32)
    context = jax.random.normal(k_ctx, (batch, in_len, attn_size), jnp.float32)

    # Deterministic synthetic parameters (shapes from nn.Linear in __init__).
    params = {
        "attn_w_w": 0.1 * jax.random.normal(k1, (attn_size, dec_size), jnp.float32),
        "attn_w_b": 0.1 * jax.random.normal(k2, (attn_size,), jnp.float32),
        "lout_w": 0.1 * jax.random.normal(k3, (dec_size, dec_size + attn_size), jnp.float32),
        "lout_b": 0.1 * jax.random.normal(k4, (dec_size,), jnp.float32),
    }

    y_ref, attn_ref = _reference(output, context, params)

    # One-time weight prep (hoisted out of the per-call path).
    prep = prepare_attention_params(params, attn_size)

    # Gridless path (single invocation; right form for single-TC v5e/v6e).
    y, attn = attention_forward(output, context, prep)
    jax.block_until_ready((y, attn))
    assert jnp.allclose(y, y_ref, atol=1e-5, rtol=1e-5)
    assert jnp.allclose(attn, attn_ref, atol=1e-5, rtol=1e-5)

    # Batch-grid path (grid=(2,), "parallel") — lets v7x's two TensorCores each
    # take one batch; still correct (just sequential) on single-TC chips.
    y2, attn2 = attention_forward(output, context, prep, batch_blocks=2)
    jax.block_until_ready((y2, attn2))
    assert jnp.allclose(y2, y_ref, atol=1e-5, rtol=1e-5)
    assert jnp.allclose(attn2, attn_ref, atol=1e-5, rtol=1e-5)

    print("KERNEL_OK")
</pallas_src>

<mosaic_0001>
module attributes {stable_mosaic.version = 11 : i64} {
  func.func @_attention_kernel(%arg0: memref<2x8x32xf32, #tpu.memory_space<vmem>>, %arg1: memref<2x8x32xf32, #tpu.memory_space<vmem>>, %arg2: memref<32x32xf32, #tpu.memory_space<vmem>>, %arg3: memref<1x32xf32, #tpu.memory_space<vmem>>, %arg4: memref<32x32xf32, #tpu.memory_space<vmem>>, %arg5: memref<32x32xf32, #tpu.memory_space<vmem>>, %arg6: memref<1x32xf32, #tpu.memory_space<vmem>>, %arg7: memref<2x8x32xf32, #tpu.memory_space<vmem>>, %arg8: memref<2x8x8xf32, #tpu.memory_space<vmem>>) attributes {dimension_semantics = [], scalar_prefetch = 0 : i64, scratch_operands = 0 : i64, tpu.core_type = #tpu.core_type<tc>} {
    %c0 = arith.constant 0 : index
    %c0_0 = arith.constant 0 : index
    %c0_1 = arith.constant 0 : index
    %0 = vector.load %arg0[%c0, %c0_0, %c0_1] : memref<2x8x32xf32, #tpu.memory_space<vmem>>, vector<2x8x32xf32>
    %c0_2 = arith.constant 0 : index
    %c0_3 = arith.constant 0 : index
    %c0_4 = arith.constant 0 : index
    %1 = vector.load %arg1[%c0_2, %c0_3, %c0_4] : memref<2x8x32xf32, #tpu.memory_space<vmem>>, vector<2x8x32xf32>
    %2 = vector.shape_cast %0 : vector<2x8x32xf32> to vector<16x32xf32>
    %c0_5 = arith.constant 0 : index
    %c0_6 = arith.constant 0 : index
    %3 = vector.load %arg2[%c0_5, %c0_6] : memref<32x32xf32, #tpu.memory_space<vmem>>, vector<32x32xf32>
    %cst = arith.constant dense<0.000000e+00> : vector<16x32xf32>
    %4 = tpu.matmul %2, %3, %cst {dimension_numbers = #tpu.dot_dimension_numbers<[1], [0], [0], [1], [0, 0, 1, 1], [], []>} : vector<16x32xf32>, vector<32x32xf32>, vector<16x32xf32> -> vector<16x32xf32>
    %c0_7 = arith.constant 0 : index
    %c0_8 = arith.constant 0 : index
    %5 = vector.load %arg3[%c0_7, %c0_8] : memref<1x32xf32, #tpu.memory_space<vmem>>, vector<1x32xf32>
    %6 = vector.broadcast %5 : vector<1x32xf32> to vector<16x32xf32>
    %7 = arith.addf %4, %6 : vector<16x32xf32>
    %8 = vector.shape_cast %7 : vector<16x32xf32> to vector<2x8x32xf32>
    "tpu.trace_start"() <{level = 10 : i32, message = "boa,bia->boi"}> : () -> ()
    %cst_9 = arith.constant dense<0.000000e+00> : vector<2x8x8xf32>
    %9 = tpu.matmul %8, %1, %cst_9 {dimension_numbers = #tpu.dot_dimension_numbers<[2], [2], [1], [1], [0, 0, 0, 1, 1, 1], [0], [0]>} : vector<2x8x32xf32>, vector<2x8x32xf32>, vector<2x8x8xf32> -> vector<2x8x8xf32>
    "tpu.trace_stop"() : () -> ()
    %cst_10 = arith.constant dense<0xFF800000> : vector<2x8xf32>
    %10 = vector.multi_reduction <maximumf>, %9, %cst_10 [2] : vector<2x8x8xf32> to vector<2x8xf32>
    %11 = vector.shape_cast %10 : vector<2x8xf32> to vector<2x8x1xf32>
    %12 = vector.broadcast %11 : vector<2x8x1xf32> to vector<2x8x8xf32>
    %13 = arith.subf %9, %12 : vector<2x8x8xf32>
    %14 = math.exp %13 : vector<2x8x8xf32>
    %cst_11 = arith.constant dense<0.000000e+00> : vector<2x8xf32>
    %15 = vector.multi_reduction <add>, %14, %cst_11 [2] : vector<2x8x8xf32> to vector<2x8xf32>
    %16 = vector.shape_cast %15 : vector<2x8xf32> to vector<2x8x1xf32>
    %17 = tpu.reciprocal %16 : vector<2x8x1xf32> -> vector<2x8x1xf32>
    %18 = vector.broadcast %17 : vector<2x8x1xf32> to vector<2x8x8xf32>
    %19 = arith.mulf %14, %18 : vector<2x8x8xf32>
    "tpu.trace_start"() <{level = 10 : i32, message = "boi,bia->boa"}> : () -> ()
    %cst_12 = arith.constant dense<0.000000e+00> : vector<2x8x32xf32>
    %20 = tpu.matmul %19, %1, %cst_12 {dimension_numbers = #tpu.dot_dimension_numbers<[2], [1], [1], [2], [0, 0, 0, 1, 1, 2], [0], [0]>} : vector<2x8x8xf32>, vector<2x8x32xf32>, vector<2x8x32xf32> -> vector<2x8x32xf32>
    "tpu.trace_stop"() : () -> ()
    %21 = vector.shape_cast %20 : vector<2x8x32xf32> to vector<16x32xf32>
    %c0_13 = arith.constant 0 : index
    %c0_14 = arith.constant 0 : index
    %22 = vector.load %arg4[%c0_13, %c0_14] : memref<32x32xf32, #tpu.memory_space<vmem>>, vector<32x32xf32>
    %cst_15 = arith.constant dense<0.000000e+00> : vector<16x32xf32>
    %23 = tpu.matmul %21, %22, %cst_15 {dimension_numbers = #tpu.dot_dimension_numbers<[1], [0], [0], [1], [0, 0, 1, 1], [], []>} : vector<16x32xf32>, vector<32x32xf32>, vector<16x32xf32> -> vector<16x32xf32>
    %c0_16 = arith.constant 0 : index
    %c0_17 = arith.constant 0 : index
    %24 = vector.load %arg5[%c0_16, %c0_17] : memref<32x32xf32, #tpu.memory_space<vmem>>, vector<32x32xf32>
    %cst_18 = arith.constant dense<0.000000e+00> : vector<16x32xf32>
    %25 = tpu.matmul %2, %24, %cst_18 {dimension_numbers = #tpu.dot_dimension_numbers<[1], [0], [0], [1], [0, 0, 1, 1], [], []>} : vector<16x32xf32>, vector<32x32xf32>, vector<16x32xf32> -> vector<16x32xf32>
    %26 = arith.addf %23, %25 : vector<16x32xf32>
    %c0_19 = arith.constant 0 : index
    %c0_20 = arith.constant 0 : index
    %27 = vector.load %arg6[%c0_19, %c0_20] : memref<1x32xf32, #tpu.memory_space<vmem>>, vector<1x32xf32>
    %28 = vector.broadcast %27 : vector<1x32xf32> to vector<16x32xf32>
    %29 = arith.addf %26, %28 : vector<16x32xf32>
    %30 = math.tanh %29 : vector<16x32xf32>
    %31 = vector.shape_cast %30 : vector<16x32xf32> to vector<2x8x32xf32>
    %c0_21 = arith.constant 0 : index
    %c0_22 = arith.constant 0 : index
    %c0_23 = arith.constant 0 : index
    %32 = vector.load %arg7[%c0_21, %c0_22, %c0_23] : memref<2x8x32xf32, #tpu.memory_space<vmem>>, vector<2x8x32xf32>
    tpu.vector_store %arg7[%c0_21, %c0_22, %c0_23], %31 {strides = array<i32>} : memref<2x8x32xf32, #tpu.memory_space<vmem>>, vector<2x8x32xf32>,
    %c0_24 = arith.constant 0 : index
    %c0_25 = arith.constant 0 : index
    %c0_26 = arith.constant 0 : index
    %33 = vector.load %arg8[%c0_24, %c0_25, %c0_26] : memref<2x8x8xf32, #tpu.memory_space<vmem>>, vector<2x8x8xf32>
    tpu.vector_store %arg8[%c0_24, %c0_25, %c0_26], %19 {strides = array<i32>} : memref<2x8x8xf32, #tpu.memory_space<vmem>>, vector<2x8x8xf32>,
    return
  }
}

</mosaic_0001>

<llo_original>
// kernel: tpu_custom_call.1
$region0: #{tpu_custom_call.1}
  #allocation0 [shape = 'u32[]', space=smem, size = 0x4, offset = 0x4, fixed_abs, tag = 'smem constant byte address 0x4 - core index']
  #allocation1 [shape = 'u32[144,128]{1,0:T(1,128)}', space=vmem, size = 0x12000, scoped, tag = 'internal scratch']
  %s0 = inlined_call_operand.hbm [shape: f32[2,8,32], index: 0, kind: input, shape index: {}]
  %s1 = inlined_call_operand.hbm [shape: f32[2,8,32], index: 1, kind: input, shape index: {}]
  %s2 = inlined_call_operand.hbm [shape: f32[32,32], index: 2, kind: input, shape index: {}]
  %s3 = inlined_call_operand.vmem [shape: f32[1,32], index: 3, kind: input, shape index: {}]
  %s4 = inlined_call_operand.hbm [shape: f32[32,32], index: 4, kind: input, shape index: {}]
  %s5 = inlined_call_operand.hbm [shape: f32[32,32], index: 5, kind: input, shape index: {}]
  %s6 = inlined_call_operand.vmem [shape: f32[1,32], index: 6, kind: input, shape index: {}]
  %s7 = inlined_call_operand.hbm [shape: f32[2,8,32], index: 7, kind: output, shape index: {0}]
  %s8 = inlined_call_operand.hbm [shape: f32[2,8,8], index: 8, kind: output, shape index: {1}]
  %9 = xla_tuple %s7, %s8
  %s10 = sld [smem:[#allocation0]]
  $region66: #{tpu_custom_call.1} parent=0
    _
  %s12 = ssub.s32 1, %s10
  %s13 = scalar_select 0, %s12, %s10
  $region1: #{tpu_custom_call.1} parent=0
    #allocation2 [shape = 'u8[8192]{0}', space=vmem, size = 0x2000, scoped, tag = 'input window, operand 0, single buffered']
    #allocation3 [shape = 's32[1]{0}', space=sflag, size = 0x4, scoped, tag = 'scoped memory for tpu_custom_call.1']
    #allocation4 [shape = 's32[1]{0}', space=sflag, size = 0x4, scoped, tag = 'scoped memory for tpu_custom_call.1']
    #allocation5 [shape = 'u8[8192]{0}', space=vmem, size = 0x2000, scoped, tag = 'input window, operand 1, single buffered']
    #allocation6 [shape = 's32[1]{0}', space=sflag, size = 0x4, scoped, tag = 'scoped memory for tpu_custom_call.1']
    #allocation7 [shape = 'u8[16384]{0}', space=vmem, size = 0x4000, scoped, tag = 'input window, operand 2, single buffered']
    #allocation8 [shape = 'u8[16384]{0}', space=vmem, size = 0x4000, scoped, tag = 'input window, operand 4, single buffered']
    #allocation9 [shape = 's32[1]{0}', space=sflag, size = 0x4, scoped, tag = 'scoped memory for tpu_custom_call.1']
    #allocation10 [shape = 'u8[16384]{0}', space=vmem, size = 0x4000, scoped, tag = 'input window, operand 5, single buffered']
    #allocation11 [shape = 'u8[8192]{0}', space=vmem, size = 0x2000, scoped, tag = 'output window, operand 0, single buffered']
    #allocation12 [shape = 'u8[8192]{0}', space=vmem, size = 0x2000, scoped, tag = 'output window, operand 1, single buffered']
    #allocation13 [shape = 's32[1]{0}', space=sflag, size = 0x4, scoped, tag = 'scoped memory for tpu_custom_call.1']
    %14 = vsyncpa [#allocation3], 0
    %15 = vsyncpa [#allocation6], 0
    %16 = vsyncpa [#allocation9], 0
    %17 = vsyncpa [#allocation4], 0
    %18 = vsyncpa [#allocation13], 0
    // Predicated region
    $region2: #{tpu_custom_call.1} parent=1 // pred_check
      _
    $region3: #{tpu_custom_call.1} parent=1 // pred_check_branch
      %20 = sbr.rel (0) target = $region5
    $region4: #{tpu_custom_call.1} parent=1 // pred_region
      %s22 = ssub.s32 256, 256
      %23 = vsyncadd [#allocation3], %s22
      %s24 = sshll.u32 [#allocation2], 4
      %s25 = int_to_ptr.vmem [resolvable:$true] %s24
      %30 = dma.hbm_to_vmem [thread:$0]  %s0, 256, %s25, [#allocation3], 128, 128, 8
    $region5: #{tpu_custom_call.1} parent=1 // pred_fallthru
      _
    // Predicated region
    $region6: #{tpu_custom_call.1} parent=1 // pred_check
      _
    $region7: #{tpu_custom_call.1} parent=1 // pred_check_branch
      %32 = sbr.rel (0) target = $region9
    $region8: #{tpu_custom_call.1} parent=1 // pred_region
      %s34 = ssub.s32 256, 256
      %35 = vsyncadd [#allocation6], %s34
      %s36 = sshll.u32 [#allocation5], 4
      %s37 = int_to_ptr.vmem [resolvable:$true] %s36
      %42 = dma.hbm_to_vmem [thread:$0]  %s1, 256, %s37, [#allocation6], 128, 128, 8
    $region9: #{tpu_custom_call.1} parent=1 // pred_fallthru
      _
    // Predicated region
    $region10: #{tpu_custom_call.1} parent=1 // pred_check
      _
    $region11: #{tpu_custom_call.1} parent=1 // pred_check_branch
      %44 = sbr.rel (0) target = $region13
    $region12: #{tpu_custom_call.1} parent=1 // pred_region
      %s46 = ssub.s32 512, 512
      %47 = vsyncadd [#allocation6], %s46
      %s48 = sshll.u32 [#allocation7], 4
      %s49 = int_to_ptr.vmem [resolvable:$true] %s48
      %54 = dma.hbm_to_vmem [thread:$0]  %s2, 512, %s49, [#allocation6], 128, 128, 8
    $region13: #{tpu_custom_call.1} parent=1 // pred_fallthru
      _
    // Predicated region
    $region14: #{tpu_custom_call.1} parent=1 // pred_check
      _
    $region15: #{tpu_custom_call.1} parent=1 // pred_check_branch
      %56 = sbr.rel (0) target = $region17
    $region16: #{tpu_custom_call.1} parent=1 // pred_region
      _
    $region17: #{tpu_custom_call.1} parent=1 // pred_fallthru
      _
    // Predicated region
    $region18: #{tpu_custom_call.1} parent=1 // pred_check
      _
    $region19: #{tpu_custom_call.1} parent=1 // pred_check_branch
      %58 = sbr.rel (0) target = $region21
    $region20: #{tpu_custom_call.1} parent=1 // pred_region
      %s60 = ssub.s32 512, 512
      %61 = vsyncadd [#allocation9], %s60
      %s62 = sshll.u32 [#allocation8], 4
      %s63 = int_to_ptr.vmem [resolvable:$true] %s62
      %68 = dma.hbm_to_vmem [thread:$0]  %s4, 512, %s63, [#allocation9], 128, 128, 8
    $region21: #{tpu_custom_call.1} parent=1 // pred_fallthru
      _
    // Predicated region
    $region22: #{tpu_custom_call.1} parent=1 // pred_check
      _
    $region23: #{tpu_custom_call.1} parent=1 // pred_check_branch
      %70 = sbr.rel (0) target = $region25
    $region24: #{tpu_custom_call.1} parent=1 // pred_region
      %s72 = ssub.s32 512, 512
      %73 = vsyncadd [#allocation9], %s72
      %s74 = sshll.u32 [#allocation10], 4
      %s75 = int_to_ptr.vmem [resolvable:$true] %s74
      %80 = dma.hbm_to_vmem [thread:$0]  %s5, 512, %s75, [#allocation9], 128, 128, 8
    $region25: #{tpu_custom_call.1} parent=1 // pred_fallthru
      _
    // Predicated region
    $region26: #{tpu_custom_call.1} parent=1 // pred_check
      _
    $region27: #{tpu_custom_call.1} parent=1 // pred_check_branch
      %82 = sbr.rel (0) target = $region29
    $region28: #{tpu_custom_call.1} parent=1 // pred_region
      _
    $region29: #{tpu_custom_call.1} parent=1 // pred_fallthru
      _
    // Predicated region
    $region30: #{tpu_custom_call.1} parent=1 // pred_check
      _
    $region31: #{tpu_custom_call.1} parent=1 // pred_check_branch
      %84 = sbr.rel (0) target = $region33
    $region32: #{tpu_custom_call.1} parent=1 // pred_region
      %85 = dma.done [#allocation3], 256
    $region33: #{tpu_custom_call.1} parent=1 // pred_fallthru
      _
    // Predicated region
    $region34: #{tpu_custom_call.1} parent=1 // pred_check
      _
    $region35: #{tpu_custom_call.1} parent=1 // pred_check_branch
      %87 = sbr.rel (0) target = $region37
    $region36: #{tpu_custom_call.1} parent=1 // pred_region
      %88 = dma.done [#allocation6], 256
    $region37: #{tpu_custom_call.1} parent=1 // pred_fallthru
      _
    // Predicated region
    $region38: #{tpu_custom_call.1} parent=1 // pred_check
      _
    $region39: #{tpu_custom_call.1} parent=1 // pred_check_branch
      %90 = sbr.rel (0) target = $region41
    $region40: #{tpu_custom_call.1} parent=1 // pred_region
      %91 = dma.done [#allocation6], 512
    $region41: #{tpu_custom_call.1} parent=1 // pred_fallthru
      _
    // Predicated region
    $region42: #{tpu_custom_call.1} parent=1 // pred_check
      _
    $region43: #{tpu_custom_call.1} parent=1 // pred_check_branch
      %93 = sbr.rel (0) target = $region45
    $region44: #{tpu_custom_call.1} parent=1 // pred_region
      %94 = dma.done [#allocation9], 512
    $region45: #{tpu_custom_call.1} parent=1 // pred_fallthru
      _
    // Predicated region
    $region46: #{tpu_custom_call.1} parent=1 // pred_check
      _
    $region47: #{tpu_custom_call.1} parent=1 // pred_check_branch
      %96 = sbr.rel (0) target = $region49
    $region48: #{tpu_custom_call.1} parent=1 // pred_region
      %97 = dma.done [#allocation9], 512
    $region49: #{tpu_custom_call.1} parent=1 // pred_fallthru
      _
    %v98 = vld [vmem:[#allocation2] sm:$0xff]
    %v99 = vld [vmem:[#allocation2 + $0x8] sm:$0xff]
    %v100 = vld [vmem:[#allocation5] sm:$0xff]
    %v101 = vld [vmem:[#allocation5 + $0x8] sm:$0xff]
    %v102 = vld [vmem:[#allocation7] sm:$0xff]
    %v103 = vld [vmem:[#allocation7 + $0x8] sm:$0xff]
    %v104 = vld [vmem:[#allocation7 + $0x10] sm:$0xff]
    %v105 = vld [vmem:[#allocation7 + $0x18] sm:$0xff]
    %v106 = vld [vmem:[%s3] sm:$0x1]
    %v108 = vlaneseq
    %v109 = vshrl.u32 %v108, 7
    %v110 = vsub.s32 0, %v109
    %v111 = vrot.slane %v106, %v110
    %vm113 = vcmask 261120
    %v115 = vsel %vm113, %v98, 0
    %v118 = vsel %vm113, %v99, 0
    %120 = vmatprep.subr.mxu0 0.0
    %121 = vmatpush1.msra.mxu0 %v102
    %122 = vmatprep.subr.mxu0 0.0
    %123 = vmatpush1.msra.mxu0 %v103
    %124 = vmatprep.subr.mxu0 0.0
    %125 = vmatpush1.msra.mxu0 %v104
    %126 = vmatprep.subr.mxu0 0.0
    %127 = vmatpush1.msra.mxu0 %v105
    %128 = vmatprep.subr.mxu0 0.0
    %129 = vmatpush1.msra.mxu0 0.0
    %130 = vmatprep.subr.mxu0 0.0
    %131 = vmatpush1.msra.mxu0 0.0
    %132 = vmatprep.subr.mxu0 0.0
    %133 = vmatpush1.msra.mxu0 0.0
    %134 = vmatprep.subr.mxu0 0.0
    %135 = vmatpush1.msra.mxu0 0.0
    %136 = vmatprep.subr.mxu0 0.0
    %137 = vmatpush1.msra.mxu0 0.0
    %138 = vmatprep.subr.mxu0 0.0
    %139 = vmatpush1.msra.mxu0 0.0
    %140 = vmatprep.subr.mxu0 0.0
    %141 = vmatpush1.msra.mxu0 0.0
    %142 = vmatprep.subr.mxu0 0.0
    %143 = vmatpush1.msra.mxu0 0.0
    %144 = vmatprep.subr.mxu0 0.0
    %145 = vmatpush1.msra.mxu0 0.0
    %146 = vmatprep.subr.mxu0 0.0
    %147 = vmatpush1.msra.mxu0 0.0
    %148 = vmatprep.subr.mxu0 0.0
    %149 = vmatpush1.msra.mxu0 0.0
    %150 = vmatprep.subr.mxu0 0.0
    %151 = vmatpush1.msra.mxu0 0.0
    %152 = vmatprep.subr.mxu0 0.0
    %153 = vmatpush1.msra.mxu0 0.0
    %154 = vmatprep.subr.mxu0 0.0
    %155 = vmatpush1.msra.mxu0 0.0
    %156 = vmatprep.subr.mxu0 0.0
    %157 = vmatpush1.msra.mxu0 0.0
    %158 = vmatprep.subr.mxu0 0.0
    %159 = vmatpush1.msra.mxu0 0.0
    %160 = vmatprep.subr.mxu0 0.0
    %161 = vmatpush1.msra.mxu0 0.0
    %162 = vmatprep.subr.mxu0 0.0
    %163 = vmatpush1.msra.mxu0 0.0
    %164 = vmatprep.subr.mxu0 0.0
    %165 = vmatpush1.msra.mxu0 0.0
    %166 = vmatprep.subr.mxu0 0.0
    %167 = vmatpush1.msra.mxu0 0.0
    %168 = vmatprep.subr.mxu0 0.0
    %169 = vmatpush1.msra.mxu0 0.0
    %170 = vmatprep.subr.mxu0 0.0
    %171 = vmatpush1.msra.mxu0 0.0
    %172 = vmatprep.subr.mxu0 0.0
    %173 = vmatpush1.msra.mxu0 0.0
    %174 = vmatprep.subr.mxu0 0.0
    %175 = vmatpush1.msra.mxu0 0.0
    %176 = vmatprep.subr.mxu0 0.0
    %177 = vmatpush1.msra.mxu0 0.0
    %178 = vmatprep.subr.mxu0 0.0
    %179 = vmatpush1.msra.mxu0 0.0
    %180 = vmatprep.subr.mxu0 0.0
    %181 = vmatpush1.msra.mxu0 0.0
    %182 = vmatprep.subr.mxu0 0.0
    %183 = vmatpush1.msra.mxu0 0.0
    %184 = vmatprep.mubr.f32.mxu0 0.0
    %185 = vmatmul.mubr.f32.gmra.mrb[0].mxu0 %v115
    %v186 = vpop.f32.mrb[0].mxu0
    %v187 = vadd.f32 %v111, %v186
    %v188 = vpop.f32.mrb[0].mxu0
    %189 = vmatprep.mubr.f32.mxu0 0.0
    %190 = vmatmul.mubr.f32.gmra.mrb[0].mxu0 %v118
    %v191 = vpop.f32.mrb[0].mxu0
    %v192 = vadd.f32 %v111, %v191
    %v193 = vpop.f32.mrb[0].mxu0
    %194 = vdwg.mxu0
    %v196 = vsel %vm113, %v187, 0
    %v199 = vsel %vm113, %v100, 0
    %201 = vmatprep.subr.mxu0 0.0
    %202 = vmatpush1.xpose.msra.mxu0 %v199
    %203 = vmatprep.subr.mxu0 0.0
    %204 = vmatpush1.xpose.msra.mxu0 0.0
    %205 = vmatprep.subr.mxu0 0.0
    %206 = vmatpush1.xpose.msra.mxu0 0.0
    %207 = vmatprep.subr.mxu0 0.0
    %208 = vmatpush1.xpose.msra.mxu0 0.0
    %209 = vmatprep.subr.mxu0 0.0
    %210 = vmatpush1.xpose.msra.mxu0 0.0
    %211 = vmatprep.subr.mxu0 0.0
    %212 = vmatpush1.xpose.msra.mxu0 0.0
    %213 = vmatprep.subr.mxu0 0.0
    %214 = vmatpush1.xpose.msra.mxu0 0.0
    %215 = vmatprep.subr.mxu0 0.0
    %216 = vmatpush1.xpose.msra.mxu0 0.0
    %217 = vmatprep.subr.mxu0 0.0
    %218 = vmatpush1.xpose.msra.mxu0 0.0
    %219 = vmatprep.subr.mxu0 0.0
    %220 = vmatpush1.xpose.msra.mxu0 0.0
    %221 = vmatprep.subr.mxu0 0.0
    %222 = vmatpush1.xpose.msra.mxu0 0.0
    %223 = vmatprep.subr.mxu0 0.0
    %224 = vmatpush1.xpose.msra.mxu0 0.0
    %225 = vmatprep.subr.mxu0 0.0
    %226 = vmatpush1.xpose.msra.mxu0 0.0
    %227 = vmatprep.subr.mxu0 0.0
    %228 = vmatpush1.xpose.msra.mxu0 0.0
    %229 = vmatprep.subr.mxu0 0.0
    %230 = vmatpush1.xpose.msra.mxu0 0.0
    %231 = vmatprep.subr.mxu0 0.0
    %232 = vmatpush1.xpose.msra.mxu0 0.0
    %233 = vmatprep.subr.mxu0 0.0
    %234 = vmatpush1.xpose.msra.mxu0 0.0
    %235 = vmatprep.subr.mxu0 0.0
    %236 = vmatpush1.xpose.msra.mxu0 0.0
    %237 = vmatprep.subr.mxu0 0.0
    %238 = vmatpush1.xpose.msra.mxu0 0.0
    %239 = vmatprep.subr.mxu0 0.0
    %240 = vmatpush1.xpose.msra.mxu0 0.0
    %241 = vmatprep.subr.mxu0 0.0
    %242 = vmatpush1.xpose.msra.mxu0 0.0
    %243 = vmatprep.subr.mxu0 0.0
    %244 = vmatpush1.xpose.msra.mxu0 0.0
    %245 = vmatprep.subr.mxu0 0.0
    %246 = vmatpush1.xpose.msra.mxu0 0.0
    %247 = vmatprep.subr.mxu0 0.0
    %248 = vmatpush1.xpose.msra.mxu0 0.0
    %249 = vmatprep.subr.mxu0 0.0
    %250 = vmatpush1.xpose.msra.mxu0 0.0
    %251 = vmatprep.subr.mxu0 0.0
    %252 = vmatpush1.xpose.msra.mxu0 0.0
    %253 = vmatprep.subr.mxu0 0.0
    %254 = vmatpush1.xpose.msra.mxu0 0.0
    %255 = vmatprep.subr.mxu0 0.0
    %256 = vmatpush1.xpose.msra.mxu0 0.0
    %257 = vmatprep.subr.mxu0 0.0
    %258 = vmatpush1.xpose.msra.mxu0 0.0
    %259 = vmatprep.subr.mxu0 0.0
    %260 = vmatpush1.xpose.msra.mxu0 0.0
    %261 = vmatprep.subr.mxu0 0.0
    %262 = vmatpush1.xpose.msra.mxu0 0.0
    %263 = vmatprep.subr.mxu0 0.0
    %264 = vmatpush1.xpose.msra.mxu0 0.0
    %265 = vmatprep.mubr.f32.mxu0 0.0
    %266 = vmatmul.mubr.f32.gmra.mrb[0].mxu0 %v196
    %v267 = vpop.f32.mrb[0].mxu0
    %v268 = vadd.f32 0.0, %v267
    %v269 = vpop.f32.mrb[0].mxu0
    %270 = vdwg.mxu0
    %v272 = vsel %vm113, %v192, 0
    %v275 = vsel %vm113, %v101, 0
    %277 = vmatprep.subr.mxu0 0.0
    %278 = vmatpush1.xpose.msra.mxu0 %v275
    %279 = vmatprep.subr.mxu0 0.0
    %280 = vmatpush1.xpose.msra.mxu0 0.0
    %281 = vmatprep.subr.mxu0 0.0
    %282 = vmatpush1.xpose.msra.mxu0 0.0
    %283 = vmatprep.subr.mxu0 0.0
    %284 = vmatpush1.xpose.msra.mxu0 0.0
    %285 = vmatprep.subr.mxu0 0.0
    %286 = vmatpush1.xpose.msra.mxu0 0.0
    %287 = vmatprep.subr.mxu0 0.0
    %288 = vmatpush1.xpose.msra.mxu0 0.0
    %289 = vmatprep.subr.mxu0 0.0
    %290 = vmatpush1.xpose.msra.mxu0 0.0
    %291 = vmatprep.subr.mxu0 0.0
    %292 = vmatpush1.xpose.msra.mxu0 0.0
    %293 = vmatprep.subr.mxu0 0.0
    %294 = vmatpush1.xpose.msra.mxu0 0.0
    %295 = vmatprep.subr.mxu0 0.0
    %296 = vmatpush1.xpose.msra.mxu0 0.0
    %297 = vmatprep.subr.mxu0 0.0
    %298 = vmatpush1.xpose.msra.mxu0 0.0
    %299 = vmatprep.subr.mxu0 0.0
    %300 = vmatpush1.xpose.msra.mxu0 0.0
    %301 = vmatprep.subr.mxu0 0.0
    %302 = vmatpush1.xpose.msra.mxu0 0.0
    %303 = vmatprep.subr.mxu0 0.0
    %304 = vmatpush1.xpose.msra.mxu0 0.0
    %305 = vmatprep.subr.mxu0 0.0
    %306 = vmatpush1.xpose.msra.mxu0 0.0
    %307 = vmatprep.subr.mxu0 0.0
    %308 = vmatpush1.xpose.msra.mxu0 0.0
    %309 = vmatprep.subr.mxu0 0.0
    %310 = vmatpush1.xpose.msra.mxu0 0.0
    %311 = vmatprep.subr.mxu0 0.0
    %312 = vmatpush1.xpose.msra.mxu0 0.0
    %313 = vmatprep.subr.mxu0 0.0
    %314 = vmatpush1.xpose.msra.mxu0 0.0
    %315 = vmatprep.subr.mxu0 0.0
    %316 = vmatpush1.xpose.msra.mxu0 0.0
    %317 = vmatprep.subr.mxu0 0.0
    %318 = vmatpush1.xpose.msra.mxu0 0.0
    %319 = vmatprep.subr.mxu0 0.0
    %320 = vmatpush1.xpose.msra.mxu0 0.0
    %321 = vmatprep.subr.mxu0 0.0
    %322 = vmatpush1.xpose.msra.mxu0 0.0
    %323 = vmatprep.subr.mxu0 0.0
    %324 = vmatpush1.xpose.msra.mxu0 0.0
    %325 = vmatprep.subr.mxu0 0.0
    %326 = vmatpush1.xpose.msra.mxu0 0.0
    %327 = vmatprep.subr.mxu0 0.0
    %328 = vmatpush1.xpose.msra.mxu0 0.0
    %329 = vmatprep.subr.mxu0 0.0
    %330 = vmatpush1.xpose.msra.mxu0 0.0
    %331 = vmatprep.subr.mxu0 0.0
    %332 = vmatpush1.xpose.msra.mxu0 0.0
    %333 = vmatprep.subr.mxu0 0.0
    %334 = vmatpush1.xpose.msra.mxu0 0.0
    %335 = vmatprep.subr.mxu0 0.0
    %336 = vmatpush1.xpose.msra.mxu0 0.0
    %337 = vmatprep.subr.mxu0 0.0
    %338 = vmatpush1.xpose.msra.mxu0 0.0
    %339 = vmatprep.subr.mxu0 0.0
    %340 = vmatpush1.xpose.msra.mxu0 0.0
    %341 = vmatprep.mubr.f32.mxu0 0.0
    %342 = vmatmul.mubr.f32.gmra.mrb[0].mxu0 %v272
    %v343 = vpop.f32.mrb[0].mxu0
    %v344 = vadd.f32 0.0, %v343
    %v345 = vpop.f32.mrb[0].mxu0
    %346 = vdwg.mxu0
    %vm347 = vcmask 64512
    %v348 = vsel %vm347, %v268, -inf
    %349 = vmax.xlane.f32.xlu0 %v348
    %v350 = vpop.xlane.xlu0 %349
    %v351 = vsel %vm347, %v344, -inf
    %352 = vmax.xlane.f32.xlu0 %v351
    %v353 = vpop.xlane.xlu0 %352
    %v354 = vsub.f32 %v268, %v350
    %v355 = vsub.f32 %v344, %v353
    %v356 = vmul.f32 %v354, 1.442695
    %v357 = vpow.pop %v356
    %v358 = vmul.f32 %v355, 1.442695
    %v359 = vpow.pop %v358
    %v360 = vsel %vm347, %v357, 0.0
    %361 = vadd.xlane.f32.xlu0 %v360
    %v362 = vpop.xlane.xlu0 %361
    %v363 = vsel %vm347, %v359, 0.0
    %364 = vadd.xlane.f32.xlu0 %v363
    %v365 = vpop.xlane.xlu0 %364
    %v366 = vrcp.pop %v362
    %v367 = vrcp.pop %v365
    %v368 = vmul.f32 %v357, %v366
    %v369 = vmul.f32 %v359, %v367
    %v371 = vsel %vm347, %v368, 0
    %373 = vmatprep.subr.mxu0 0.0
    %374 = vmatpush1.msra.mxu0 %v100
    %375 = vmatprep.subr.mxu0 0.0
    %376 = vmatpush1.msra.mxu0 0.0
    %377 = vmatprep.subr.mxu0 0.0
    %378 = vmatpush1.msra.mxu0 0.0
    %379 = vmatprep.subr.mxu0 0.0
    %380 = vmatpush1.msra.mxu0 0.0
    %381 = vmatprep.subr.mxu0 0.0
    %382 = vmatpush1.msra.mxu0 0.0
    %383 = vmatprep.subr.mxu0 0.0
    %384 = vmatpush1.msra.mxu0 0.0
    %385 = vmatprep.subr.mxu0 0.0
    %386 = vmatpush1.msra.mxu0 0.0
    %387 = vmatprep.subr.mxu0 0.0
    %388 = vmatpush1.msra.mxu0 0.0
    %389 = vmatprep.subr.mxu0 0.0
    %390 = vmatpush1.msra.mxu0 0.0
    %391 = vmatprep.subr.mxu0 0.0
    %392 = vmatpush1.msra.mxu0 0.0
    %393 = vmatprep.subr.mxu0 0.0
    %394 = vmatpush1.msra.mxu0 0.0
    %395 = vmatprep.subr.mxu0 0.0
    %396 = vmatpush1.msra.mxu0 0.0
    %397 = vmatprep.subr.mxu0 0.0
    %398 = vmatpush1.msra.mxu0 0.0
    %399 = vmatprep.subr.mxu0 0.0
    %400 = vmatpush1.msra.mxu0 0.0
    %401 = vmatprep.subr.mxu0 0.0
    %402 = vmatpush1.msra.mxu0 0.0
    %403 = vmatprep.subr.mxu0 0.0
    %404 = vmatpush1.msra.mxu0 0.0
    %405 = vmatprep.subr.mxu0 0.0
    %406 = vmatpush1.msra.mxu0 0.0
    %407 = vmatprep.subr.mxu0 0.0
    %408 = vmatpush1.msra.mxu0 0.0
    %409 = vmatprep.subr.mxu0 0.0
    %410 = vmatpush1.msra.mxu0 0.0
    %411 = vmatprep.subr.mxu0 0.0
    %412 = vmatpush1.msra.mxu0 0.0
    %413 = vmatprep.subr.mxu0 0.0
    %414 = vmatpush1.msra.mxu0 0.0
    %415 = vmatprep.subr.mxu0 0.0
    %416 = vmatpush1.msra.mxu0 0.0
    %417 = vmatprep.subr.mxu0 0.0
    %418 = vmatpush1.msra.mxu0 0.0
    %419 = vmatprep.subr.mxu0 0.0
    %420 = vmatpush1.msra.mxu0 0.0
    %421 = vmatprep.subr.mxu0 0.0
    %422 = vmatpush1.msra.mxu0 0.0
    %423 = vmatprep.subr.mxu0 0.0
    %424 = vmatpush1.msra.mxu0 0.0
    %425 = vmatprep.subr.mxu0 0.0
    %426 = vmatpush1.msra.mxu0 0.0
    %427 = vmatprep.subr.mxu0 0.0
    %428 = vmatpush1.msra.mxu0 0.0
    %429 = vmatprep.subr.mxu0 0.0
    %430 = vmatpush1.msra.mxu0 0.0
    %431 = vmatprep.subr.mxu0 0.0
    %432 = vmatpush1.msra.mxu0 0.0
    %433 = vmatprep.subr.mxu0 0.0
    %434 = vmatpush1.msra.mxu0 0.0
    %435 = vmatprep.subr.mxu0 0.0
    %436 = vmatpush1.msra.mxu0 0.0
    %437 = vmatprep.mubr.f32.mxu0 0.0
    %438 = vmatmul.mubr.f32.gmra.mrb[0].mxu0 %v371
    %v439 = vpop.f32.mrb[0].mxu0
    %v440 = vadd.f32 0.0, %v439
    %v441 = vpop.f32.mrb[0].mxu0
    %442 = vdwg.mxu0
    %v444 = vsel %vm347, %v369, 0
    %446 = vmatprep.subr.mxu0 0.0
    %447 = vmatpush1.msra.mxu0 %v101
    %448 = vmatprep.subr.mxu0 0.0
    %449 = vmatpush1.msra.mxu0 0.0
    %450 = vmatprep.subr.mxu0 0.0
    %451 = vmatpush1.msra.mxu0 0.0
    %452 = vmatprep.subr.mxu0 0.0
    %453 = vmatpush1.msra.mxu0 0.0
    %454 = vmatprep.subr.mxu0 0.0
    %455 = vmatpush1.msra.mxu0 0.0
    %456 = vmatprep.subr.mxu0 0.0
    %457 = vmatpush1.msra.mxu0 0.0
    %458 = vmatprep.subr.mxu0 0.0
    %459 = vmatpush1.msra.mxu0 0.0
    %460 = vmatprep.subr.mxu0 0.0
    %461 = vmatpush1.msra.mxu0 0.0
    %462 = vmatprep.subr.mxu0 0.0
    %463 = vmatpush1.msra.mxu0 0.0
    %464 = vmatprep.subr.mxu0 0.0
    %465 = vmatpush1.msra.mxu0 0.0
    %466 = vmatprep.subr.mxu0 0.0
    %467 = vmatpush1.msra.mxu0 0.0
    %468 = vmatprep.subr.mxu0 0.0
    %469 = vmatpush1.msra.mxu0 0.0
    %470 = vmatprep.subr.mxu0 0.0
    %471 = vmatpush1.msra.mxu0 0.0
    %472 = vmatprep.subr.mxu0 0.0
    %473 = vmatpush1.msra.mxu0 0.0
    %474 = vmatprep.subr.mxu0 0.0
    %475 = vmatpush1.msra.mxu0 0.0
    %476 = vmatprep.subr.mxu0 0.0
    %477 = vmatpush1.msra.mxu0 0.0
    %478 = vmatprep.subr.mxu0 0.0
    %479 = vmatpush1.msra.mxu0 0.0
    %480 = vmatprep.subr.mxu0 0.0
    %481 = vmatpush1.msra.mxu0 0.0
    %482 = vmatprep.subr.mxu0 0.0
    %483 = vmatpush1.msra.mxu0 0.0
    %484 = vmatprep.subr.mxu0 0.0
    %485 = vmatpush1.msra.mxu0 0.0
    %486 = vmatprep.subr.mxu0 0.0
    %487 = vmatpush1.msra.mxu0 0.0
    %488 = vmatprep.subr.mxu0 0.0
    %489 = vmatpush1.msra.mxu0 0.0
    %490 = vmatprep.subr.mxu0 0.0
    %491 = vmatpush1.msra.mxu0 0.0
    %492 = vmatprep.subr.mxu0 0.0
    %493 = vmatpush1.msra.mxu0 0.0
    %494 = vmatprep.subr.mxu0 0.0
    %495 = vmatpush1.msra.mxu0 0.0
    %496 = vmatprep.subr.mxu0 0.0
    %497 = vmatpush1.msra.mxu0 0.0
    %498 = vmatprep.subr.mxu0 0.0
    %499 = vmatpush1.msra.mxu0 0.0
    %500 = vmatprep.subr.mxu0 0.0
    %501 = vmatpush1.msra.mxu0 0.0
    %502 = vmatprep.subr.mxu0 0.0
    %503 = vmatpush1.msra.mxu0 0.0
    %504 = vmatprep.subr.mxu0 0.0
    %505 = vmatpush1.msra.mxu0 0.0
    %506 = vmatprep.subr.mxu0 0.0
    %507 = vmatpush1.msra.mxu0 0.0
    %508 = vmatprep.subr.mxu0 0.0
    %509 = vmatpush1.msra.mxu0 0.0
    %510 = vmatprep.mubr.f32.mxu0 0.0
    %511 = vmatmul.mubr.f32.gmra.mrb[0].mxu0 %v444
    %v512 = vpop.f32.mrb[0].mxu0
    %v513 = vadd.f32 0.0, %v512
    %v514 = vpop.f32.mrb[0].mxu0
    %515 = vdwg.mxu0
    %v516 = vld [vmem:[#allocation8] sm:$0xff]
    %v517 = vld [vmem:[#allocation8 + $0x8] sm:$0xff]
    %v518 = vld [vmem:[#allocation8 + $0x10] sm:$0xff]
    %v519 = vld [vmem:[#allocation8 + $0x18] sm:$0xff]
    %v520 = vld [vmem:[#allocation10] sm:$0xff]
    %v521 = vld [vmem:[#allocation10 + $0x8] sm:$0xff]
    %v522 = vld [vmem:[#allocation10 + $0x10] sm:$0xff]
    %v523 = vld [vmem:[#allocation10 + $0x18] sm:$0xff]
    %524 = vmatprep.subr.mxu0 0.0
    %525 = vmatpush1.msra.mxu0 %v520
    %526 = vmatprep.subr.mxu0 0.0
    %527 = vmatpush1.msra.mxu0 %v521
    %528 = vmatprep.subr.mxu0 0.0
    %529 = vmatpush1.msra.mxu0 %v522
    %530 = vmatprep.subr.mxu0 0.0
    %531 = vmatpush1.msra.mxu0 %v523
    %532 = vmatprep.subr.mxu0 0.0
    %533 = vmatpush1.msra.mxu0 0.0
    %534 = vmatprep.subr.mxu0 0.0
    %535 = vmatpush1.msra.mxu0 0.0
    %536 = vmatprep.subr.mxu0 0.0
    %537 = vmatpush1.msra.mxu0 0.0
    %538 = vmatprep.subr.mxu0 0.0
    %539 = vmatpush1.msra.mxu0 0.0
    %540 = vmatprep.subr.mxu0 0.0
    %541 = vmatpush1.msra.mxu0 0.0
    %542 = vmatprep.subr.mxu0 0.0
    %543 = vmatpush1.msra.mxu0 0.0
    %544 = vmatprep.subr.mxu0 0.0
    %545 = vmatpush1.msra.mxu0 0.0
    %546 = vmatprep.subr.mxu0 0.0
    %547 = vmatpush1.msra.mxu0 0.0
    %548 = vmatprep.subr.mxu0 0.0
    %549 = vmatpush1.msra.mxu0 0.0
    %550 = vmatprep.subr.mxu0 0.0
    %551 = vmatpush1.msra.mxu0 0.0
    %552 = vmatprep.subr.mxu0 0.0
    %553 = vmatpush1.msra.mxu0 0.0
    %554 = vmatprep.subr.mxu0 0.0
    %555 = vmatpush1.msra.mxu0 0.0
    %556 = vmatprep.subr.mxu0 0.0
    %557 = vmatpush1.msra.mxu0 0.0
    %558 = vmatprep.subr.mxu0 0.0
    %559 = vmatpush1.msra.mxu0 0.0
    %560 = vmatprep.subr.mxu0 0.0
    %561 = vmatpush1.msra.mxu0 0.0
    %562 = vmatprep.subr.mxu0 0.0
    %563 = vmatpush1.msra.mxu0 0.0
    %564 = vmatprep.subr.mxu0 0.0
    %565 = vmatpush1.msra.mxu0 0.0
    %566 = vmatprep.subr.mxu0 0.0
    %567 = vmatpush1.msra.mxu0 0.0
    %568 = vmatprep.subr.mxu0 0.0
    %569 = vmatpush1.msra.mxu0 0.0
    %570 = vmatprep.subr.mxu0 0.0
    %571 = vmatpush1.msra.mxu0 0.0
    %572 = vmatprep.subr.mxu0 0.0
    %573 = vmatpush1.msra.mxu0 0.0
    %574 = vmatprep.subr.mxu0 0.0
    %575 = vmatpush1.msra.mxu0 0.0
    %576 = vmatprep.subr.mxu0 0.0
    %577 = vmatpush1.msra.mxu0 0.0
    %578 = vmatprep.subr.mxu0 0.0
    %579 = vmatpush1.msra.mxu0 0.0
    %580 = vmatprep.subr.mxu0 0.0
    %581 = vmatpush1.msra.mxu0 0.0
    %582 = vmatprep.subr.mxu0 0.0
    %583 = vmatpush1.msra.mxu0 0.0
    %584 = vmatprep.subr.mxu0 0.0
    %585 = vmatpush1.msra.mxu0 0.0
    %586 = vmatprep.subr.mxu0 0.0
    %587 = vmatpush1.msra.mxu0 0.0
    %588 = vmatprep.mubr.f32.mxu0 0.0
    %589 = vmatmul.mubr.f32.gmra.mrb[0].mxu0 %v115
    %v590 = vpop.f32.mrb[0].mxu0
    %v591 = vadd.f32 0.0, %v590
    %v592 = vpop.f32.mrb[0].mxu0
    %593 = vmatprep.mubr.f32.mxu0 0.0
    %594 = vmatmul.mubr.f32.gmra.mrb[0].mxu0 %v118
    %v595 = vpop.f32.mrb[0].mxu0
    %v596 = vadd.f32 0.0, %v595
    %v597 = vpop.f32.mrb[0].mxu0
    %598 = vdwg.mxu0
    %v600 = vsel %vm113, %v440, 0
    %v603 = vsel %vm113, %v513, 0
    %605 = vmatprep.subr.mxu0 0.0
    %606 = vmatpush1.msra.mxu0 %v516
    %607 = vmatprep.subr.mxu0 0.0
    %608 = vmatpush1.msra.mxu0 %v517
    %609 = vmatprep.subr.mxu0 0.0
    %610 = vmatpush1.msra.mxu0 %v518
    %611 = vmatprep.subr.mxu0 0.0
    %612 = vmatpush1.msra.mxu0 %v519
    %613 = vmatprep.subr.mxu0 0.0
    %614 = vmatpush1.msra.mxu0 0.0
    %615 = vmatprep.subr.mxu0 0.0
    %616 = vmatpush1.msra.mxu0 0.0
    %617 = vmatprep.subr.mxu0 0.0
    %618 = vmatpush1.msra.mxu0 0.0
    %619 = vmatprep.subr.mxu0 0.0
    %620 = vmatpush1.msra.mxu0 0.0
    %621 = vmatprep.subr.mxu0 0.0
    %622 = vmatpush1.msra.mxu0 0.0
    %623 = vmatprep.subr.mxu0 0.0
    %624 = vmatpush1.msra.mxu0 0.0
    %625 = vmatprep.subr.mxu0 0.0
    %626 = vmatpush1.msra.mxu0 0.0
    %627 = vmatprep.subr.mxu0 0.0
    %628 = vmatpush1.msra.mxu0 0.0
    %629 = vmatprep.subr.mxu0 0.0
    %630 = vmatpush1.msra.mxu0 0.0
    %631 = vmatprep.subr.mxu0 0.0
    %632 = vmatpush1.msra.mxu0 0.0
    %633 = vmatprep.subr.mxu0 0.0
    %634 = vmatpush1.msra.mxu0 0.0
    %635 = vmatprep.subr.mxu0 0.0
    %636 = vmatpush1.msra.mxu0 0.0
    %637 = vmatprep.subr.mxu0 0.0
    %638 = vmatpush1.msra.mxu0 0.0
    %639 = vmatprep.subr.mxu0 0.0
    %640 = vmatpush1.msra.mxu0 0.0
    %641 = vmatprep.subr.mxu0 0.0
    %642 = vmatpush1.msra.mxu0 0.0
    %643 = vmatprep.subr.mxu0 0.0
    %644 = vmatpush1.msra.mxu0 0.0
    %645 = vmatprep.subr.mxu0 0.0
    %646 = vmatpush1.msra.mxu0 0.0
    %647 = vmatprep.subr.mxu0 0.0
    %648 = vmatpush1.msra.mxu0 0.0
    %649 = vmatprep.subr.mxu0 0.0
    %650 = vmatpush1.msra.mxu0 0.0
    %651 = vmatprep.subr.mxu0 0.0
    %652 = vmatpush1.msra.mxu0 0.0
    %653 = vmatprep.subr.mxu0 0.0
    %654 = vmatpush1.msra.mxu0 0.0
    %655 = vmatprep.subr.mxu0 0.0
    %656 = vmatpush1.msra.mxu0 0.0
    %657 = vmatprep.subr.mxu0 0.0
    %658 = vmatpush1.msra.mxu0 0.0
    %659 = vmatprep.subr.mxu0 0.0
    %660 = vmatpush1.msra.mxu0 0.0
    %661 = vmatprep.subr.mxu0 0.0
    %662 = vmatpush1.msra.mxu0 0.0
    %663 = vmatprep.subr.mxu0 0.0
    %664 = vmatpush1.msra.mxu0 0.0
    %665 = vmatprep.subr.mxu0 0.0
    %666 = vmatpush1.msra.mxu0 0.0
    %667 = vmatprep.subr.mxu0 0.0
    %668 = vmatpush1.msra.mxu0 0.0
    %669 = vmatprep.mubr.f32.mxu0 0.0
    %670 = vmatmul.mubr.f32.gmra.mrb[0].mxu0 %v600
    %v671 = vpop.f32.mrb[0].mxu0
    %v672 = vadd.f32 %v591, %v671
    %v673 = vpop.f32.mrb[0].mxu0
    %674 = vmatprep.mubr.f32.mxu0 0.0
    %675 = vmatmul.mubr.f32.gmra.mrb[0].mxu0 %v603
    %v676 = vpop.f32.mrb[0].mxu0
    %v677 = vadd.f32 %v596, %v676
    %v678 = vpop.f32.mrb[0].mxu0
    %679 = vdwg.mxu0
    %v680 = vld [vmem:[%s6] sm:$0x1]
    %v682 = vlaneseq
    %v683 = vshrl.u32 %v682, 7
    %v684 = vsub.s32 0, %v683
    %v685 = vrot.slane %v680, %v684
    %v687 = vadd.f32 %v672, %v685
    %v688 = vadd.f32 %v677, %v685
    %v689 = vtanh.pop %v687
    %v690 = vtanh.pop %v688
    %691 = vst.msk [vmem:[#allocation11] sm:$0xff] %vm113, %v689
    %692 = vst.msk [vmem:[#allocation11 + $0x8] sm:$0xff] %vm113, %v690
    %693 = vst.msk [vmem:[#allocation12] sm:$0xff] %vm347, %v368
    %694 = vst.msk [vmem:[#allocation12 + $0x8] sm:$0xff] %vm347, %v369
    // Predicated region
    $region50: #{tpu_custom_call.1} parent=1 // pred_check
      _
    $region51: #{tpu_custom_call.1} parent=1 // pred_check_branch
      %696 = sbr.rel (0) target = $region53
    $region52: #{tpu_custom_call.1} parent=1 // pred_region
      %s698 = ssub.s32 256, 256
      %699 = vsyncadd [#allocation4], %s698
      %s700 = sshll.u32 [#allocation11], 4
      %s701 = int_to_ptr.vmem [resolvable:$true] %s700
      %706 = dma.vmem_to_hbm [thread:$0]  %s701, 256, %s7, [#allocation4], 128, 128, 8
    $region53: #{tpu_custom_call.1} parent=1 // pred_fallthru
      _
    // Predicated region
    $region54: #{tpu_custom_call.1} parent=1 // pred_check
      _
    $region55: #{tpu_custom_call.1} parent=1 // pred_check_branch
      %708 = sbr.rel (0) target = $region57
    $region56: #{tpu_custom_call.1} parent=1 // pred_region
      %s710 = ssub.s32 256, 256
      %711 = vsyncadd [#allocation13], %s710
      %s712 = sshll.u32 [#allocation12], 4
      %s713 = int_to_ptr.vmem [resolvable:$true] %s712
      %718 = dma.vmem_to_hbm [thread:$0]  %s713, 256, %s8, [#allocation13], 128, 128, 8
    $region57: #{tpu_custom_call.1} parent=1 // pred_fallthru
      _
    // Predicated region
    $region58: #{tpu_custom_call.1} parent=1 // pred_check
      _
    $region59: #{tpu_custom_call.1} parent=1 // pred_check_branch
      %720 = sbr.rel (0) target = $region61
    $region60: #{tpu_custom_call.1} parent=1 // pred_region
      %721 = dma.done [#allocation4], 256
    $region61: #{tpu_custom_call.1} parent=1 // pred_fallthru
      _
    // Predicated region
    $region62: #{tpu_custom_call.1} parent=1 // pred_check
      _
    $region63: #{tpu_custom_call.1} parent=1 // pred_check_branch
      %723 = sbr.rel (0) target = $region65
    $region64: #{tpu_custom_call.1} parent=1 // pred_region
      %724 = dma.done [#allocation13], 256
    $region65: #{tpu_custom_call.1} parent=1 // pred_fallthru
      _
    %725 = vsyncpa [#allocation3], 1
    %726 = vsyncpa [#allocation6], 1
    %727 = vsyncpa [#allocation9], 1
    %728 = vsyncpa [#allocation4], 1
    %729 = vsyncpa [#allocation13], 1

</llo_original>
